<compile_context>
chip_gen: v5e
topology: v5e:2x2
jax: 0.10.0
libtpu: 0.0.40
codegen_flags: <defaults>
</compile_context>

<pallas_src>
import functools

import jax
import jax.numpy as jnp
from jax.experimental import pallas as pl
from jax.experimental.pallas import tpu as pltpu

# ScaleIntensityRange constants from the module.
A_MIN = -963.8247715525971
A_MAX = 1053.678477684517
B_MIN = 0.0
B_MAX = 1.0

_VMEM_LIMIT = 32 * 1024 * 1024  # safe on v5e/v6e (128 MiB phys) and v7x (64 MiB phys)


# ----------------------------------------------------------------------------
# Kernel 1: ScaleIntensityRange (elementwise affine rescale), tiled + pipelined
# ----------------------------------------------------------------------------
def _scale_intensity_kernel(x_ref, o_ref):
    scale = (B_MAX - B_MIN) / (A_MAX - A_MIN)
    o_ref[...] = (x_ref[...] - A_MIN) * scale + B_MIN


def scale_intensity(x, lane=512, max_block_rows=256):
    """MONAI ScaleIntensityRange (no clipping) as a tiled Pallas elementwise kernel."""
    orig_shape = x.shape
    flat = x.reshape(-1)
    n = flat.shape[0]
    rows = pl.cdiv(n, lane)
    block_rows = min(max_block_rows, ((rows + 7) // 8) * 8)
    rows_p = ((rows + block_rows - 1) // block_rows) * block_rows
    pad = rows_p * lane - n
    if pad:
        flat = jnp.pad(flat, (0, pad))
    mat = flat.reshape(rows_p, lane)
    out = pl.pallas_call(
        _scale_intensity_kernel,
        out_shape=jax.ShapeDtypeStruct(mat.shape, mat.dtype),
        grid=(rows_p // block_rows,),
        in_specs=[pl.BlockSpec((block_rows, lane), lambda i: (i, 0))],
        out_specs=pl.BlockSpec((block_rows, lane), lambda i: (i, 0)),
        compiler_params=pltpu.CompilerParams(dimension_semantics=("parallel",)),
    )(mat)
    return out.reshape(-1)[:n].reshape(orig_shape)


# ----------------------------------------------------------------------------
# Kernel 2: (M,N,K)-tiled matmul, bf16 streams, f32 accumulation in the output
#           block, fused bias add + optional ReLU (the conv hot path)
# ----------------------------------------------------------------------------
def _matmul_bias_act_kernel(a_ref, w_ref, b_ref, o_ref, *, apply_relu):
    k = pl.program_id(2)

    @pl.when(k == 0)
    def _():
        o_ref[...] = jnp.zeros_like(o_ref)

    o_ref[...] += jnp.dot(a_ref[...], w_ref[...],
                          preferred_element_type=jnp.float32)

    @pl.when(k == pl.num_programs(2) - 1)
    def _():
        r = o_ref[...] + b_ref[...]
        if apply_relu:
            r = jnp.maximum(r, 0.0)
        o_ref[...] = r


def _choose_tk(K, tn, bytes_per_elem=2, tile_budget_bytes=4 * 1024 * 1024):
    """Largest K tile that is a multiple of 128, divides padded-K exactly, and keeps
    the weight tile (tk x tn) under the per-step VMEM budget."""
    Kp = ((K + 127) // 128) * 128
    max_tk = max(128, (tile_budget_bytes // (tn * bytes_per_elem)) // 128 * 128)
    best = 128
    d = 128
    while d <= min(Kp, max_tk):
        if Kp % d == 0:
            best = d
        d += 128
    return Kp, best


def _choose_tm(M):
    """M tile: multiple of 16 (bf16 sublane packing), capped at 256."""
    if M >= 256:
        tm = 256
    elif M >= 128:
        tm = 128
    else:
        tm = max(16, ((M + 15) // 16) * 16)
    Mp = ((M + tm - 1) // tm) * tm
    return Mp, tm


def matmul_bias_act(a, layer, apply_relu):
    """out = relu?(a @ wmat + bias).  a: (M, K) f32/bf16; layer holds the
    precomputed bf16 weight matrix (Kp, N), f32 bias (1, N) and tiling meta."""
    M, K = a.shape
    Kp, tk, N, tn = layer["Kp"], layer["tk"], layer["N"], layer["tn"]
    wmat, bias = layer["wmat"], layer["bias"]

    Mp, tm = _choose_tm(M)
    if Mp != M or Kp != K:
        a = jnp.pad(a, ((0, Mp - M), (0, Kp - K)))
    a = a.astype(jnp.bfloat16)

    nm = Mp // tm
    nn = N // tn
    nk = Kp // tk

    out = pl.pallas_call(
        functools.partial(_matmul_bias_act_kernel, apply_relu=apply_relu),
        out_shape=jax.ShapeDtypeStruct((Mp, N), jnp.float32),
        grid_spec=pltpu.PrefetchScalarGridSpec(
            num_scalar_prefetch=0,
            grid=(nm, nn, nk),  # reduction axis last
            in_specs=[
                pl.BlockSpec((tm, tk), lambda m, n, k: (m, k)),
                pl.BlockSpec((tk, tn), lambda m, n, k: (k, n)),
                pl.BlockSpec((1, tn), lambda m, n, k: (0, n)),
            ],
            out_specs=pl.BlockSpec((tm, tn), lambda m, n, k: (m, n)),
        ),
        compiler_params=pltpu.CompilerParams(
            dimension_semantics=("parallel", "parallel", "arbitrary"),
            vmem_limit_bytes=_VMEM_LIMIT),
    )(a, wmat, bias)
    return out[:M]


# ----------------------------------------------------------------------------
# Kernel 3: F.normalize(x, dim=1)  (L2 row-normalize, eps=1e-12, via rsqrt)
# ----------------------------------------------------------------------------
def _l2_normalize_kernel(x_ref, o_ref):
    x = x_ref[...]
    ss = jnp.sum(x * x, axis=1, keepdims=True)
    # max(sqrt(ss), eps) == sqrt(max(ss, eps^2))  ->  multiply by rsqrt (EUP slot)
    o_ref[...] = x * jax.lax.rsqrt(jnp.maximum(ss, 1e-24))


def l2_normalize(x):
    B, F = x.shape
    Bp = max(8, ((B + 7) // 8) * 8)
    xp = jnp.pad(x, ((0, Bp - B), (0, 0))) if Bp != B else x
    out = pl.pallas_call(
        _l2_normalize_kernel,
        out_shape=jax.ShapeDtypeStruct((Bp, F), jnp.float32),
        grid=(1,),
        in_specs=[pl.BlockSpec((Bp, F), lambda i: (0, 0))],
        out_specs=pl.BlockSpec((Bp, F), lambda i: (0, 0)),
    )(xp)
    return out[:B]


# ----------------------------------------------------------------------------
# Glue: channels-last im2col for Conv3d(k=3, stride=2, pad=1), params, forward
# ----------------------------------------------------------------------------
def im2col_3d_cl(x, k=3, stride=2, pad=1):
    """x: (B, D, H, W, C) channels-last -> patches (B*oD*oH*oW, k^3*C),
    feature order (kd, kh, kw, C)."""
    B, D, H, W, C = x.shape
    xp = jnp.pad(x, ((0, 0), (pad, pad), (pad, pad), (pad, pad), (0, 0)))
    oD = (D + 2 * pad - k) // stride + 1
    oH = (H + 2 * pad - k) // stride + 1
    oW = (W + 2 * pad - k) // stride + 1
    cols = []
    for dz in range(k):
        for dy in range(k):
            for dx in range(k):
                sl = jax.lax.slice(
                    xp,
                    (0, dz, dy, dx, 0),
                    (B,
                     dz + (oD - 1) * stride + 1,
                     dy + (oH - 1) * stride + 1,
                     dx + (oW - 1) * stride + 1,
                     C),
                    (1, stride, stride, stride, 1))
                cols.append(sl)  # (B, oD, oH, oW, C)
    patches = jnp.stack(cols, axis=4)                 # (B, oD, oH, oW, 27, C)
    patches = patches.reshape(B * oD * oH * oW, k * k * k * C)
    return patches, (B, oD, oH, oW)


def init_params(key):
    """Deterministic synthetic PyTorch-shaped weights for the `final` head."""
    chans = [(768, 512), (512, 256), (256, 128)]
    keys = jax.random.split(key, 2 * len(chans))
    params = []
    for i, (cin, cout) in enumerate(chans):
        fan_in = cin * 27
        w = jax.random.normal(keys[2 * i], (cout, cin, 3, 3, 3),
                              jnp.float32) * (1.0 / jnp.sqrt(fan_in))
        b = jax.random.normal(keys[2 * i + 1], (cout,), jnp.float32) * 0.01
        params.append((w, b))
    return params


def prepare_params(params, tn_max=256):
    """One-time weight prep: (Cout,Cin,kd,kh,kw) -> (kd,kh,kw,Cin)xCout matrix,
    padded to an exact K-tile multiple, cast to bf16; bias kept f32 (1, N)."""
    prepped = []
    for (w, b) in params:
        Cout, Cin, kd, kh, kw = w.shape
        K = Cin * kd * kh * kw
        N = Cout
        tn = min(N, tn_max)
        Kp, tk = _choose_tk(K, tn)
        wmat = jnp.transpose(w, (2, 3, 4, 1, 0)).reshape(K, N)
        if Kp != K:
            wmat = jnp.pad(wmat, ((0, Kp - K), (0, 0)))
        prepped.append(dict(
            wmat=wmat.astype(jnp.bfloat16),
            bias=b.reshape(1, N).astype(jnp.float32),
            K=K, Kp=Kp, tk=tk, N=N, tn=tn,
        ))
    return prepped


def get_embed_forward(x_raw, embed_last, prepped):
    """Mirror of get_embed.forward.

    x_raw:      raw intensity volume fed to ScaleIntensityRange, (B, 1, D, H, W)
    embed_last: stand-in for encoder(...)[-1], (B, 768, d, h, w) (NCDHW)
    """
    _x_scaled = scale_intensity(x_raw)  # transform step (Pallas elementwise kernel)
    # TODO(synk): VISTA3D pretrained image encoder (config/checkpoint-driven backbone)
    # has no in-script Pallas equivalent; `embed_last` stands in for encoder(x)[-1].
    h = jnp.transpose(embed_last, (0, 2, 3, 4, 1))  # NCDHW -> channels-last, once
    n_layers = len(prepped)
    for i, layer in enumerate(prepped):
        patches, (B, oD, oH, oW) = im2col_3d_cl(h)
        out = matmul_bias_act(patches, layer, apply_relu=(i < n_layers - 1))
        h = out.reshape(B, oD, oH, oW, layer["N"])  # stay channels-last between layers
    # nn.Flatten() operates on NCDHW -> restore channel-major feature ordering once.
    flat = jnp.transpose(h, (0, 4, 1, 2, 3)).reshape(h.shape[0], -1)
    return l2_normalize(flat)                       # F.normalize(ret, dim=1)


if __name__ == "__main__":
    key = jax.random.PRNGKey(0)
    k_raw, k_emb, k_par = jax.random.split(key, 3)

    # Small deterministic inputs consistent with the module.
    x_raw = jax.random.uniform(k_raw, (2, 1, 16, 16, 16), jnp.float32,
                               minval=-1000.0, maxval=1000.0)
    embed_last = jax.random.normal(k_emb, (2, 768, 4, 4, 4), jnp.float32)
    params = init_params(k_par)
    prepped = prepare_params(params)   # weight transpose/pad/bf16 cast happens ONCE

    out = get_embed_forward(x_raw, embed_last, prepped)
    out = jax.block_until_ready(out)

    assert out.shape == (2, 128), out.shape
    assert bool(jnp.all(jnp.isfinite(out)))
    print("KERNEL_OK")
</pallas_src>

<mosaic_0001>
module attributes {stable_mosaic.version = 11 : i64} {
  func.func @_scale_intensity_kernel(%arg0: i32, %arg1: memref<16x512xf32, #tpu.memory_space<vmem>>, %arg2: memref<16x512xf32, #tpu.memory_space<vmem>>) attributes {dimension_semantics = [#tpu.dimension_semantics<parallel>], iteration_bounds = array<i64: 1>, scalar_prefetch = 0 : i64, scratch_operands = 0 : i64, tpu.core_type = #tpu.core_type<tc>, window_params = [{transform_indices = @transform_0, window_bounds = array<i64: 16, 512>}, {transform_indices = @transform_1, window_bounds = array<i64: 16, 512>}]} {
    %c0 = arith.constant 0 : index
    %c0_0 = arith.constant 0 : index
    %0 = vector.load %arg1[%c0, %c0_0] : memref<16x512xf32, #tpu.memory_space<vmem>>, vector<16x512xf32>
    %cst = arith.constant -963.824768 : f32
    %1 = vector.broadcast %cst : f32 to vector<16x512xf32>
    %2 = arith.subf %0, %1 : vector<16x512xf32>
    %cst_1 = arith.constant 4.95662156E-4 : f32
    %3 = vector.broadcast %cst_1 : f32 to vector<16x512xf32>
    %4 = arith.mulf %2, %3 : vector<16x512xf32>
    %cst_2 = arith.constant 0.000000e+00 : f32
    %5 = vector.broadcast %cst_2 : f32 to vector<16x512xf32>
    %6 = arith.addf %4, %5 : vector<16x512xf32>
    %c0_3 = arith.constant 0 : index
    %c0_4 = arith.constant 0 : index
    %7 = vector.load %arg2[%c0_3, %c0_4] : memref<16x512xf32, #tpu.memory_space<vmem>>, vector<16x512xf32>
    tpu.vector_store %arg2[%c0_3, %c0_4], %6 {strides = array<i32>} : memref<16x512xf32, #tpu.memory_space<vmem>>, vector<16x512xf32>,
    return
  }
  func.func @transform_0(%arg0: i32) -> (i32, i32) {
    %c0_i32 = arith.constant 0 : i32
    %c0_i32_0 = arith.constant 0 : i32
    return %arg0, %c0_i32 : i32, i32
  }
  func.func @transform_1(%arg0: i32) -> (i32, i32) {
    %c0_i32 = arith.constant 0 : i32
    %c0_i32_0 = arith.constant 0 : i32
    return %arg0, %c0_i32 : i32, i32
  }
}

</mosaic_0001>

<llo_original>
// kernel: tpu_custom_call.1
$region0: #{tpu_custom_call.1}
  #allocation0 [shape = 'u32[]', space=smem, size = 0x4, offset = 0x4, fixed_abs, tag = 'smem constant byte address 0x4 - core index']
  #allocation1 [shape = 'u32[72,128]{1,0:T(1,128)}', space=vmem, size = 0x9000, scoped, tag = 'internal scratch']
  %s0 = inlined_call_operand.hbm [shape: f32[16,512], index: 0, kind: input, shape index: {}]
  %s1 = inlined_call_operand.hbm [shape: f32[16,512], index: 1, kind: output, shape index: {}]
  %s2 = sld [smem:[#allocation0]]
  $region18: #{tpu_custom_call.1} parent=0
    _
  %s4 = ssub.s32 1, %s2
  %s5 = scalar_select 0, %s4, %s2
  $region1: #{tpu_custom_call.1} parent=0
    #allocation2 [shape = 'u8[32768]{0}', space=vmem, size = 0x8000, scoped, tag = 'input window, operand 0, single buffered']
    #allocation3 [shape = 's32[1]{0}', space=sflag, size = 0x4, scoped, tag = 'scoped memory for tpu_custom_call.1']
    #allocation4 [shape = 's32[1]{0}', space=sflag, size = 0x4, scoped, tag = 'scoped memory for tpu_custom_call.1']
    #allocation5 [shape = 'u8[32768]{0}', space=vmem, size = 0x8000, scoped, tag = 'output window, operand 0, single buffered']
    %6 = vsyncpa [#allocation3], 0
    %7 = vsyncpa [#allocation4], 0
    // Predicated region
    $region2: #{tpu_custom_call.1} parent=1 // pred_check
      _
    $region3: #{tpu_custom_call.1} parent=1 // pred_check_branch
      %9 = sbr.rel (0) target = $region5
    $region4: #{tpu_custom_call.1} parent=1 // pred_region
      %11 = vsyncadd [#allocation3], 0
      %s12 = sshll.u32 %s0, 4
      %s13 = int_to_ptr.hbm [resolvable:$true] %s12
      %s14 = sshll.u32 [#allocation2], 4
      %s15 = int_to_ptr.vmem [resolvable:$true] %s14
      %20 = dma.hbm_to_vmem [thread:$0]  %s13, 1024, %s15, [#allocation3], 512, 512, 32
    $region5: #{tpu_custom_call.1} parent=1 // pred_fallthru
      _
    // Predicated region
    $region6: #{tpu_custom_call.1} parent=1 // pred_check
      _
    $region7: #{tpu_custom_call.1} parent=1 // pred_check_branch
      %22 = sbr.rel (0) target = $region9
    $region8: #{tpu_custom_call.1} parent=1 // pred_region
      %24 = dma.done [#allocation3], 1024
    $region9: #{tpu_custom_call.1} parent=1 // pred_fallthru
      _
    %v25 = vld [vmem:[#allocation2] sm:$0xff]
    %v26 = vld [vmem:[#allocation2 + $0x8] sm:$0xff]
    %v27 = vld [vmem:[#allocation2 + $0x10] sm:$0xff]
    %v28 = vld [vmem:[#allocation2 + $0x18] sm:$0xff]
    %v29 = vld [vmem:[#allocation2 + $0x20] sm:$0xff]
    %v30 = vld [vmem:[#allocation2 + $0x28] sm:$0xff]
    %v31 = vld [vmem:[#allocation2 + $0x30] sm:$0xff]
    %v32 = vld [vmem:[#allocation2 + $0x38] sm:$0xff]
    %v33 = vsub.f32 %v25, -963.82477
    %v34 = vsub.f32 %v26, -963.82477
    %v35 = vsub.f32 %v27, -963.82477
    %v36 = vsub.f32 %v28, -963.82477
    %v37 = vsub.f32 %v29, -963.82477
    %v38 = vsub.f32 %v30, -963.82477
    %v39 = vsub.f32 %v31, -963.82477
    %v40 = vsub.f32 %v32, -963.82477
    %v41 = vmul.f32 %v33, 0.00049566216
    %v42 = vmul.f32 %v34, 0.00049566216
    %v43 = vmul.f32 %v35, 0.00049566216
    %v44 = vmul.f32 %v36, 0.00049566216
    %v45 = vmul.f32 %v37, 0.00049566216
    %v46 = vmul.f32 %v38, 0.00049566216
    %v47 = vmul.f32 %v39, 0.00049566216
    %v48 = vmul.f32 %v40, 0.00049566216
    %v49 = vadd.f32 %v41, 0.0
    %v50 = vadd.f32 %v42, 0.0
    %v51 = vadd.f32 %v43, 0.0
    %v52 = vadd.f32 %v44, 0.0
    %v53 = vadd.f32 %v45, 0.0
    %v54 = vadd.f32 %v46, 0.0
    %v55 = vadd.f32 %v47, 0.0
    %v56 = vadd.f32 %v48, 0.0
    %57 = vst [vmem:[#allocation5] sm:$0xff] %v49
    %58 = vst [vmem:[#allocation5 + $0x8] sm:$0xff] %v50
    %59 = vst [vmem:[#allocation5 + $0x10] sm:$0xff] %v51
    %60 = vst [vmem:[#allocation5 + $0x18] sm:$0xff] %v52
    %61 = vst [vmem:[#allocation5 + $0x20] sm:$0xff] %v53
    %62 = vst [vmem:[#allocation5 + $0x28] sm:$0xff] %v54
    %63 = vst [vmem:[#allocation5 + $0x30] sm:$0xff] %v55
    %64 = vst [vmem:[#allocation5 + $0x38] sm:$0xff] %v56
    // Predicated region
    $region10: #{tpu_custom_call.1} parent=1 // pred_check
      _
    $region11: #{tpu_custom_call.1} parent=1 // pred_check_branch
      %66 = sbr.rel (0) target = $region13
    $region12: #{tpu_custom_call.1} parent=1 // pred_region
      %68 = vsyncadd [#allocation4], 0
      %s69 = sshll.u32 [#allocation5], 4
      %s70 = int_to_ptr.vmem [resolvable:$true] %s69
      %s71 = sshll.u32 %s1, 4
      %s72 = int_to_ptr.hbm [resolvable:$true] %s71
      %77 = dma.vmem_to_hbm [thread:$0]  %s70, 1024, %s72, [#allocation4], 512, 512, 32
    $region13: #{tpu_custom_call.1} parent=1 // pred_fallthru
      _
    // Predicated region
    $region14: #{tpu_custom_call.1} parent=1 // pred_check
      _
    $region15: #{tpu_custom_call.1} parent=1 // pred_check_branch
      %79 = sbr.rel (0) target = $region17
    $region16: #{tpu_custom_call.1} parent=1 // pred_region
      %81 = dma.done [#allocation4], 1024
    $region17: #{tpu_custom_call.1} parent=1 // pred_fallthru
      _
    %82 = vsyncpa [#allocation3], 1
    %83 = vsyncpa [#allocation4], 1

</llo_original>
